<compile_context>
chip_gen: v6e
topology: v6e:2x2x1
jax: 0.10.0
libtpu: 0.0.40
codegen_flags: <defaults>
</compile_context>

<pallas_src>
import math

import jax
import jax.numpy as jnp
from jax.experimental import pallas as pl
from jax.experimental.pallas import tpu as pltpu


def _identity_kernel(x_ref, o_ref):
    # Elementwise pass-through on the current VMEM tile.
    o_ref[...] = x_ref[...]


def _sublane_multiple(dtype) -> int:
    """Sublane packing multiple: 8 for 32-bit, 16 for bf16, 32 for int8/fp8."""
    itemsize = jnp.dtype(dtype).itemsize
    if itemsize >= 4:
        return 8
    return 8 * (4 // itemsize)


def _base_model_forward_impl(x: jax.Array) -> jax.Array:
    """Identity forward (abstract BaseModel defines no computation)."""
    orig_shape = x.shape
    total = math.prod(orig_shape) if orig_shape else 1

    if total == 0:
        # Nothing to copy.
        return x

    dtype = jnp.dtype(x.dtype)
    itemsize = dtype.itemsize
    sub = _sublane_multiple(dtype)

    # Lane-dense layout: lane dim is always a multiple of 128; widen it up to
    # 1024 for larger arrays so each block is a wide, unmasked store slab.
    lane = 128
    while lane < 1024 and total >= (lane * 2) * sub:
        lane *= 2

    # Block rows: sublane-aligned, capped at ~2 MiB per buffer (v5e-safe with
    # double-buffered in + out pipelining; v6e/v7x have more headroom).
    max_block_bytes = 2 << 20
    bytes_per_row = lane * itemsize
    block_rows = max(sub, (max_block_bytes // bytes_per_row) // sub * sub)

    rows_needed = pl.cdiv(total, lane)
    rows_needed_rounded = pl.cdiv(rows_needed, sub) * sub
    block_rows = min(block_rows, rows_needed_rounded)

    # Pad to a whole number of (block_rows, lane) blocks: no ragged last block,
    # no masked partial stores, (8,128) BlockSpec rule always satisfied.
    grid_size = pl.cdiv(rows_needed, block_rows)
    rows = grid_size * block_rows
    padded_total = rows * lane

    flat = x.reshape(-1)
    if padded_total != total:
        flat = jnp.pad(flat, (0, padded_total - total))
    x2d = flat.reshape(rows, lane)

    out2d = pl.pallas_call(
        _identity_kernel,
        out_shape=jax.ShapeDtypeStruct((rows, lane), x2d.dtype),
        grid_spec=pltpu.PrefetchScalarGridSpec(
            num_scalar_prefetch=0,
            grid=(grid_size,),
            in_specs=[pl.BlockSpec((block_rows, lane), lambda i: (i, 0))],
            out_specs=pl.BlockSpec((block_rows, lane), lambda i: (i, 0)),
        ),
        compiler_params=pltpu.CompilerParams(
            dimension_semantics=("parallel",),
        ),
        # Pure memory traffic: read + write of the whole (padded) array.
        cost_estimate=pl.CostEstimate(
            flops=0,
            transcendentals=0,
            bytes_accessed=2 * padded_total * itemsize,
        ),
    )(x2d)

    out_flat = out2d.reshape(-1)
    if padded_total != total:
        out_flat = out_flat[:total]
    return out_flat.reshape(orig_shape)


base_model_forward = jax.jit(_base_model_forward_impl)


if __name__ == "__main__":
    key = jax.random.PRNGKey(0)
    # Small NCHW input consistent with a typical vision-model base class.
    x = jax.random.normal(key, (2, 4, 16, 16), dtype=jnp.float32)

    y = base_model_forward(x)
    jax.block_until_ready(y)

    # Sanity check: identity semantics (the only defined behavior).
    assert y.shape == x.shape and y.dtype == x.dtype
    assert bool(jnp.allclose(y, x))

    print("KERNEL_OK")
</pallas_src>

<mosaic_0001>
module attributes {stable_mosaic.version = 11 : i64} {
  func.func @_identity_kernel(%arg0: i32, %arg1: memref<8x256xf32, #tpu.memory_space<vmem>>, %arg2: memref<8x256xf32, #tpu.memory_space<vmem>>) attributes {dimension_semantics = [#tpu.dimension_semantics<parallel>], iteration_bounds = array<i64: 1>, scalar_prefetch = 0 : i64, scratch_operands = 0 : i64, tpu.core_type = #tpu.core_type<tc>, window_params = [{transform_indices = @transform_0, window_bounds = array<i64: 8, 256>}, {transform_indices = @transform_1, window_bounds = array<i64: 8, 256>}]} {
    %c0 = arith.constant 0 : index
    %c0_0 = arith.constant 0 : index
    %0 = vector.load %arg1[%c0, %c0_0] : memref<8x256xf32, #tpu.memory_space<vmem>>, vector<8x256xf32>
    %c0_1 = arith.constant 0 : index
    %c0_2 = arith.constant 0 : index
    %1 = vector.load %arg2[%c0_1, %c0_2] : memref<8x256xf32, #tpu.memory_space<vmem>>, vector<8x256xf32>
    tpu.vector_store %arg2[%c0_1, %c0_2], %0 {strides = array<i32>} : memref<8x256xf32, #tpu.memory_space<vmem>>, vector<8x256xf32>,
    return
  }
  func.func @transform_0(%arg0: i32) -> (i32, i32) {
    %c0_i32 = arith.constant 0 : i32
    %c0_i32_0 = arith.constant 0 : i32
    return %arg0, %c0_i32 : i32, i32
  }
  func.func @transform_1(%arg0: i32) -> (i32, i32) {
    %c0_i32 = arith.constant 0 : i32
    %c0_i32_0 = arith.constant 0 : i32
    return %arg0, %c0_i32 : i32, i32
  }
}

</mosaic_0001>

<llo_original>
// kernel: _base_model_forward_impl.1
$region0: #{_base_model_forward_impl.1}
  #allocation0 [shape = 'u32[]', space=smem, size = 0x4, offset = 0x4, fixed_abs, tag = 'smem constant byte address 0x4 - core index']
  #allocation1 [shape = 'u32[144,128]{1,0:T(1,128)}', space=vmem, size = 0x12000, scoped, tag = 'internal scratch']
  %s0 = inlined_call_operand.vmem [shape: f32[8,256], index: 0, kind: input, shape index: {}]
  %s1 = inlined_call_operand.vmem [shape: f32[8,256], index: 1, kind: output, shape index: {}]
  %s2 = sld [smem:[#allocation0]]
  $region14: #{_base_model_forward_impl.1} parent=0
    _
  %s4 = ssub.s32 1, %s2
  %s5 = scalar_select 0, %s4, %s2
  // Predicated region
  $region2: #{_base_model_forward_impl.1} parent=0 // pred_check
    _
  $region3: #{_base_model_forward_impl.1} parent=0 // pred_check_branch
    %7 = sbr.rel (0) target = $region5
  $region4: #{_base_model_forward_impl.1} parent=0 // pred_region
    _
  $region5: #{_base_model_forward_impl.1} parent=0 // pred_fallthru
    _
  %v8 = vld [vmem:[%s0] sm:$0xff]
  %v9 = vld [vmem:[%s0 + $0x8] sm:$0xff]
  %10 = vst [vmem:[%s1] sm:$0xff] %v8
  %11 = vst [vmem:[%s1 + $0x8] sm:$0xff] %v9
  // Predicated region
  $region6: #{_base_model_forward_impl.1} parent=0 // pred_check
    _
  $region7: #{_base_model_forward_impl.1} parent=0 // pred_check_branch
    %13 = sbr.rel (0) target = $region9
  $region8: #{_base_model_forward_impl.1} parent=0 // pred_region
    _
  $region9: #{_base_model_forward_impl.1} parent=0 // pred_fallthru
    _
  // Predicated region
  $region10: #{_base_model_forward_impl.1} parent=0 // pred_check
    _
  $region11: #{_base_model_forward_impl.1} parent=0 // pred_check_branch
    %15 = sbr.rel (0) target = $region13
  $region12: #{_base_model_forward_impl.1} parent=0 // pred_region
    _
  $region13: #{_base_model_forward_impl.1} parent=0 // pred_fallthru
    _

</llo_original>
